<compile_context>
chip_gen: v7x
topology: tpu7x:2x2x1
jax: 0.10.0
libtpu: 0.0.40
codegen_flags: <defaults>
</compile_context>

<pallas_src>
import math
import numpy as np
import jax
import jax.numpy as jnp
from jax.experimental import pallas as pl
from jax.experimental.pallas import tpu as pltpu

INPUT_DIM = 32    # D  (embedding dim)
OUTPUT_DIM = 5    # number of rating classes
NUM_WEIGHTS = 3   # K  (number of bilinear bases)


def orthogonal(shape, scale=1.1, rng=None):
    """Deterministic re-implementation of the module's orthogonal init."""
    flat_shape = (shape[0], int(np.prod(shape[1:])))
    a = rng.normal(0.0, 1.0, flat_shape)
    u, _, v = np.linalg.svd(a, full_matrices=False)
    q = u if u.shape == flat_shape else v
    q = q.reshape(shape)
    return np.asarray(scale * q[: shape[0], : shape[1]], dtype=np.float32)


# ----------------------------- Pallas kernels -----------------------------

def _full_kernel(wcat_ref, u_ref, it_ref, out_ref):
    """items is None branch: score a (user-tile x item-tile) block.

    wcat_ref: VMEM (O*D, D)   dense layer folded into bilinear bases, rows
                              o*D:(o+1)*D hold W_eff[o] (resident, tiny)
    u_ref   : VMEM (tb, D)    gathered user-embedding tile
    it_ref  : VMEM (D, tn)    pre-transposed item embeddings (lane-dense on items)
    out_ref : VMEM (O, tb, tn) bfloat16, each block written exactly once
    """
    D = u_ref.shape[1]
    O = out_ref.shape[0]
    # ONE MXU pass builds all five per-class projections of the item tile.
    wit = jnp.dot(wcat_ref[...], it_ref[...],
                  preferred_element_type=jnp.float32)          # (O*D, tn)
    u = u_ref[...]
    for o in range(O):                                          # static unroll, O = 5
        # Sublane-aligned row slice (offset multiple of 8) -> no lane shuffle.
        out_ref[o] = jnp.dot(u, wit[o * D:(o + 1) * D, :],
                             preferred_element_type=jnp.float32
                             ).astype(out_ref.dtype)            # (tb, tn) single bf16 store


def _pair_kernel(u_ref, i_ref, wcat_ref, dt_ref, out_ref):
    """items given branch: per-(user, item) pair scores for one batch tile.

    u_ref   : VMEM (tb, D)    gathered user embeddings
    i_ref   : VMEM (tb, D)    gathered item embeddings
    wcat_ref: VMEM (D, K*D)   bilinear bases concatenated on columns
    dt_ref  : VMEM (K, O)     dense-layer weight, transposed
    out_ref : VMEM (tb, O)
    """
    D = u_ref.shape[1]
    K = dt_ref.shape[0]
    u = u_ref[...]
    it = i_ref[...]
    # Single MXU push instead of K tiny ones.
    tmp_all = jnp.dot(u, wcat_ref[...],
                      preferred_element_type=jnp.float32)       # (tb, K*D)
    cols = [jnp.sum(tmp_all[:, k * D:(k + 1) * D] * it, axis=1, keepdims=True)
            for k in range(K)]                                  # K lane reductions
    s = jnp.concatenate(cols, axis=1)                           # (tb, K)
    # Dense layer as one small MXU matmul (replaces broadcast-accumulate chain).
    out_ref[...] = jnp.dot(s, dt_ref[...],
                           preferred_element_type=jnp.float32)  # (tb, O), single store


# ------------------------------ JAX wrapper --------------------------------

def _pick_tile(total, pref, align):
    """Full extent if small, otherwise an `align`-multiple tile (partial last block is masked)."""
    if total <= pref:
        return total
    t = (pref // align) * align
    return max(t, align)


def bidecoder_forward(u_features, i_features, users, items, W, Wd):
    """Matches BiDecoder.forward (eval mode, act = identity).

    W : (K, D, D) bilinear bases;  Wd : (O, K) dense layer weight.
    Full branch returns bfloat16 scores (rating-class logits); pair branch f32.
    """
    users_emb = jnp.take(u_features, users, axis=0).astype(jnp.float32)   # gather = glue
    B = users_emb.shape[0]
    D = u_features.shape[1]
    O, K = Wd.shape

    if items is not None:
        items_emb = jnp.take(i_features, items, axis=0).astype(jnp.float32)
        # (D, K*D): columns k*D:(k+1)*D hold W[k]
        W_cat = jnp.concatenate([W[k] for k in range(K)], axis=1).astype(jnp.float32)
        tb = _pick_tile(B, 2048, 8)     # few, large steps; footprint is KB-scale
        out = pl.pallas_call(
            _pair_kernel,
            out_shape=jax.ShapeDtypeStruct((B, O), jnp.float32),
            grid_spec=pltpu.PrefetchScalarGridSpec(
                num_scalar_prefetch=0,
                grid=(pl.cdiv(B, tb),),
                in_specs=[
                    pl.BlockSpec((tb, D), lambda i: (i, 0)),
                    pl.BlockSpec((tb, D), lambda i: (i, 0)),
                    pl.BlockSpec((D, K * D), lambda i: (0, 0)),   # resident
                    pl.BlockSpec((K, O), lambda i: (0, 0)),       # resident
                ],
                out_specs=pl.BlockSpec((tb, O), lambda i: (i, 0)),
            ),
            compiler_params=pltpu.CompilerParams(
                dimension_semantics=("parallel",)),
        )(users_emb, items_emb, W_cat, Wd.T.astype(jnp.float32))
        return out

    # items is None: score every user against every item.
    N = i_features.shape[0]
    # Fold dense layer into the bases (kills the k-loop entirely), then stack
    # the O effective bases row-wise so the kernel needs a single weight matmul.
    W_eff = jnp.einsum("ok,kij->oij", Wd, W).astype(jnp.float32)     # (O, D, D), tiny
    W_cat = W_eff.reshape(O * D, D)                                  # rows o*D:(o+1)*D = W_eff[o]
    items_T = i_features.T.astype(jnp.float32)                       # (D, N) lane-dense on items

    tb = _pick_tile(B, 256, 8)      # sublane-aligned user tile
    tn = _pick_tile(N, 2048, 128)   # lane-dense item tile
    out_dtype = jnp.bfloat16        # halves HBM writeback on the write-bound kernel

    cost = pl.CostEstimate(
        flops=2 * O * B * N * D + 2 * O * D * D * N,
        transcendentals=0,
        bytes_accessed=O * B * N * 2 + 4 * (B * D + D * N + O * D * D),
    )

    out = pl.pallas_call(
        _full_kernel,
        out_shape=jax.ShapeDtypeStruct((O, B, N), out_dtype),
        grid_spec=pltpu.PrefetchScalarGridSpec(
            num_scalar_prefetch=0,
            grid=(pl.cdiv(B, tb), pl.cdiv(N, tn)),
            in_specs=[
                pl.BlockSpec((O * D, D), lambda i, j: (0, 0)),       # W_cat resident
                pl.BlockSpec((tb, D), lambda i, j: (i, 0)),
                pl.BlockSpec((D, tn), lambda i, j: (0, j)),
            ],
            out_specs=pl.BlockSpec((O, tb, tn), lambda i, j: (0, i, j)),
        ),
        compiler_params=pltpu.CompilerParams(
            dimension_semantics=("parallel", "parallel"),            # megacore on v7x
            vmem_limit_bytes=32 * 1024 * 1024),                      # safe on v5e/v6e/v7x
        cost_estimate=cost,
    )(W_cat, users_emb, items_T)

    # (O, B, N) -> (B*N, O) only to match torch's view(-1)/stack(dim=1)/Linear
    # ordering; done on the bf16 copy (half the extra traffic).  A layout-aware
    # consumer could use the lane-dense (O, B, N) result directly and skip this.
    return jnp.transpose(out, (1, 2, 0)).reshape(B * N, O)


# ------------------------------ pure-JAX ref --------------------------------

def reference(u_features, i_features, users, items, W, Wd):
    ue = u_features[users]
    basis = []
    if items is not None:
        ie = i_features[items]
        for k in range(NUM_WEIGHTS):
            tmp = ue @ W[k]
            basis.append(jnp.sum(tmp * ie, axis=1))
    else:
        for k in range(NUM_WEIGHTS):
            tmp = ue @ W[k]
            basis.append((tmp @ i_features.T).reshape(-1))
    basis = jnp.stack(basis, axis=1)
    return basis @ Wd.T


# --------------------------------- main -------------------------------------

if __name__ == "__main__":
    # Deterministic parameter init (mirrors BiDecoder.__init__ / _init_weights)
    prng = np.random.RandomState(0)
    W_np = np.stack(
        [orthogonal([INPUT_DIM, INPUT_DIM], rng=prng) for _ in range(NUM_WEIGHTS)]
    )
    dense_init_range = math.sqrt(OUTPUT_DIM / (NUM_WEIGHTS + OUTPUT_DIM))
    Wd_np = prng.uniform(-dense_init_range, dense_init_range,
                         size=(OUTPUT_DIM, NUM_WEIGHTS)).astype(np.float32)
    W = jnp.asarray(W_np)
    Wd = jnp.asarray(Wd_np)

    # Example inputs
    key = jax.random.PRNGKey(0)
    k1, k2, k3, k4 = jax.random.split(key, 4)
    n_users, n_items, batch = 12, 16, 8
    u_features = jax.random.normal(k1, (n_users, INPUT_DIM), dtype=jnp.float32)
    i_features = jax.random.normal(k2, (n_items, INPUT_DIM), dtype=jnp.float32)
    users = jax.random.randint(k3, (batch,), 0, n_users)
    items = jax.random.randint(k4, (batch,), 0, n_items)

    # Branch 1: items=None  -> (batch * n_items, OUTPUT_DIM), bf16
    out_full = jax.block_until_ready(
        bidecoder_forward(u_features, i_features, users, None, W, Wd))
    ref_full = reference(u_features, i_features, users, None, W, Wd)
    np.testing.assert_allclose(np.asarray(out_full).astype(np.float32),
                               np.asarray(ref_full),
                               rtol=1e-2, atol=1e-2)

    # Branch 2: items given -> (batch, OUTPUT_DIM), f32
    out_pair = jax.block_until_ready(
        bidecoder_forward(u_features, i_features, users, items, W, Wd))
    ref_pair = reference(u_features, i_features, users, items, W, Wd)
    np.testing.assert_allclose(np.asarray(out_pair), np.asarray(ref_pair),
                               rtol=1e-2, atol=1e-2)

    print("KERNEL_OK")
</pallas_src>

<mosaic_0001>
module attributes {stable_mosaic.version = 11 : i64} {
  func.func @_full_kernel(%arg0: i32, %arg1: i32, %arg2: memref<160x32xf32, #tpu.memory_space<vmem>>, %arg3: memref<8x32xf32, #tpu.memory_space<vmem>>, %arg4: memref<32x16xf32, #tpu.memory_space<vmem>>, %arg5: memref<5x8x16xbf16, #tpu.memory_space<vmem>>) attributes {dimension_semantics = [#tpu.dimension_semantics<parallel>, #tpu.dimension_semantics<parallel>], iteration_bounds = array<i64: 1, 1>, scalar_prefetch = 0 : i64, scratch_operands = 0 : i64, tpu.core_type = #tpu.core_type<tc>, window_params = [{pipeline_mode = #tpu.pipeline_mode<synchronous>, transform_indices = @transform_0, window_bounds = array<i64: 160, 32>}, {transform_indices = @transform_1, window_bounds = array<i64: 8, 32>}, {transform_indices = @transform_2, window_bounds = array<i64: 32, 16>}, {transform_indices = @transform_3, window_bounds = array<i64: 5, 8, 16>}]} {
    %c0 = arith.constant 0 : index
    %c0_0 = arith.constant 0 : index
    %0 = vector.load %arg2[%c0, %c0_0] : memref<160x32xf32, #tpu.memory_space<vmem>>, vector<160x32xf32>
    %c0_1 = arith.constant 0 : index
    %c0_2 = arith.constant 0 : index
    %1 = vector.load %arg4[%c0_1, %c0_2] : memref<32x16xf32, #tpu.memory_space<vmem>>, vector<32x16xf32>
    %cst = arith.constant dense<0.000000e+00> : vector<160x16xf32>
    %2 = tpu.matmul %0, %1, %cst {dimension_numbers = #tpu.dot_dimension_numbers<[1], [0], [0], [1], [0, 0, 1, 1], [], []>} : vector<160x32xf32>, vector<32x16xf32>, vector<160x16xf32> -> vector<160x16xf32>
    %c0_3 = arith.constant 0 : index
    %c0_4 = arith.constant 0 : index
    %3 = vector.load %arg3[%c0_3, %c0_4] : memref<8x32xf32, #tpu.memory_space<vmem>>, vector<8x32xf32>
    %4 = vector.extract_strided_slice %2 {offsets = [0, 0], sizes = [32, 16], strides = [1, 1]} : vector<160x16xf32> to vector<32x16xf32>
    %cst_5 = arith.constant dense<0.000000e+00> : vector<8x16xf32>
    %5 = tpu.matmul %3, %4, %cst_5 {dimension_numbers = #tpu.dot_dimension_numbers<[1], [0], [0], [1], [0, 0, 1, 1], [], []>} : vector<8x32xf32>, vector<32x16xf32>, vector<8x16xf32> -> vector<8x16xf32>
    %6 = arith.truncf %5 : vector<8x16xf32> to vector<8x16xbf16>
    %c0_6 = arith.constant 0 : index
    %c0_7 = arith.constant 0 : index
    %c0_8 = arith.constant 0 : index
    %7 = vector.load %arg5[%c0_6, %c0_7, %c0_8] : memref<5x8x16xbf16, #tpu.memory_space<vmem>>, vector<1x8x16xbf16>
    %8 = vector.shape_cast %7 : vector<1x8x16xbf16> to vector<8x16xbf16>
    %9 = vector.shape_cast %6 : vector<8x16xbf16> to vector<1x8x16xbf16>
    tpu.vector_store %arg5[%c0_6, %c0_7, %c0_8], %9 {strides = array<i32>} : memref<5x8x16xbf16, #tpu.memory_space<vmem>>, vector<1x8x16xbf16>,
    %10 = vector.extract_strided_slice %2 {offsets = [32, 0], sizes = [32, 16], strides = [1, 1]} : vector<160x16xf32> to vector<32x16xf32>
    %cst_9 = arith.constant dense<0.000000e+00> : vector<8x16xf32>
    %11 = tpu.matmul %3, %10, %cst_9 {dimension_numbers = #tpu.dot_dimension_numbers<[1], [0], [0], [1], [0, 0, 1, 1], [], []>} : vector<8x32xf32>, vector<32x16xf32>, vector<8x16xf32> -> vector<8x16xf32>
    %12 = arith.truncf %11 : vector<8x16xf32> to vector<8x16xbf16>
    %c1 = arith.constant 1 : index
    %c0_10 = arith.constant 0 : index
    %c0_11 = arith.constant 0 : index
    %13 = vector.load %arg5[%c1, %c0_10, %c0_11] : memref<5x8x16xbf16, #tpu.memory_space<vmem>>, vector<1x8x16xbf16>
    %14 = vector.shape_cast %13 : vector<1x8x16xbf16> to vector<8x16xbf16>
    %15 = vector.shape_cast %12 : vector<8x16xbf16> to vector<1x8x16xbf16>
    tpu.vector_store %arg5[%c1, %c0_10, %c0_11], %15 {strides = array<i32>} : memref<5x8x16xbf16, #tpu.memory_space<vmem>>, vector<1x8x16xbf16>,
    %16 = vector.extract_strided_slice %2 {offsets = [64, 0], sizes = [32, 16], strides = [1, 1]} : vector<160x16xf32> to vector<32x16xf32>
    %cst_12 = arith.constant dense<0.000000e+00> : vector<8x16xf32>
    %17 = tpu.matmul %3, %16, %cst_12 {dimension_numbers = #tpu.dot_dimension_numbers<[1], [0], [0], [1], [0, 0, 1, 1], [], []>} : vector<8x32xf32>, vector<32x16xf32>, vector<8x16xf32> -> vector<8x16xf32>
    %18 = arith.truncf %17 : vector<8x16xf32> to vector<8x16xbf16>
    %c2 = arith.constant 2 : index
    %c0_13 = arith.constant 0 : index
    %c0_14 = arith.constant 0 : index
    %19 = vector.load %arg5[%c2, %c0_13, %c0_14] : memref<5x8x16xbf16, #tpu.memory_space<vmem>>, vector<1x8x16xbf16>
    %20 = vector.shape_cast %19 : vector<1x8x16xbf16> to vector<8x16xbf16>
    %21 = vector.shape_cast %18 : vector<8x16xbf16> to vector<1x8x16xbf16>
    tpu.vector_store %arg5[%c2, %c0_13, %c0_14], %21 {strides = array<i32>} : memref<5x8x16xbf16, #tpu.memory_space<vmem>>, vector<1x8x16xbf16>,
    %22 = vector.extract_strided_slice %2 {offsets = [96, 0], sizes = [32, 16], strides = [1, 1]} : vector<160x16xf32> to vector<32x16xf32>
    %cst_15 = arith.constant dense<0.000000e+00> : vector<8x16xf32>
    %23 = tpu.matmul %3, %22, %cst_15 {dimension_numbers = #tpu.dot_dimension_numbers<[1], [0], [0], [1], [0, 0, 1, 1], [], []>} : vector<8x32xf32>, vector<32x16xf32>, vector<8x16xf32> -> vector<8x16xf32>
    %24 = arith.truncf %23 : vector<8x16xf32> to vector<8x16xbf16>
    %c3 = arith.constant 3 : index
    %c0_16 = arith.constant 0 : index
    %c0_17 = arith.constant 0 : index
    %25 = vector.load %arg5[%c3, %c0_16, %c0_17] : memref<5x8x16xbf16, #tpu.memory_space<vmem>>, vector<1x8x16xbf16>
    %26 = vector.shape_cast %25 : vector<1x8x16xbf16> to vector<8x16xbf16>
    %27 = vector.shape_cast %24 : vector<8x16xbf16> to vector<1x8x16xbf16>
    tpu.vector_store %arg5[%c3, %c0_16, %c0_17], %27 {strides = array<i32>} : memref<5x8x16xbf16, #tpu.memory_space<vmem>>, vector<1x8x16xbf16>,
    %28 = vector.extract_strided_slice %2 {offsets = [128, 0], sizes = [32, 16], strides = [1, 1]} : vector<160x16xf32> to vector<32x16xf32>
    %cst_18 = arith.constant dense<0.000000e+00> : vector<8x16xf32>
    %29 = tpu.matmul %3, %28, %cst_18 {dimension_numbers = #tpu.dot_dimension_numbers<[1], [0], [0], [1], [0, 0, 1, 1], [], []>} : vector<8x32xf32>, vector<32x16xf32>, vector<8x16xf32> -> vector<8x16xf32>
    %30 = arith.truncf %29 : vector<8x16xf32> to vector<8x16xbf16>
    %c4 = arith.constant 4 : index
    %c0_19 = arith.constant 0 : index
    %c0_20 = arith.constant 0 : index
    %31 = vector.load %arg5[%c4, %c0_19, %c0_20] : memref<5x8x16xbf16, #tpu.memory_space<vmem>>, vector<1x8x16xbf16>
    %32 = vector.shape_cast %31 : vector<1x8x16xbf16> to vector<8x16xbf16>
    %33 = vector.shape_cast %30 : vector<8x16xbf16> to vector<1x8x16xbf16>
    tpu.vector_store %arg5[%c4, %c0_19, %c0_20], %33 {strides = array<i32>} : memref<5x8x16xbf16, #tpu.memory_space<vmem>>, vector<1x8x16xbf16>,
    return
  }
  func.func @transform_0(%arg0: i32, %arg1: i32) -> (i32, i32) {
    %c0_i32 = arith.constant 0 : i32
    %c0_i32_0 = arith.constant 0 : i32
    %c0_i32_1 = arith.constant 0 : i32
    return %c0_i32, %c0_i32_0 : i32, i32
  }
  func.func @transform_1(%arg0: i32, %arg1: i32) -> (i32, i32) {
    %c0_i32 = arith.constant 0 : i32
    %c0_i32_0 = arith.constant 0 : i32
    return %arg0, %c0_i32 : i32, i32
  }
  func.func @transform_2(%arg0: i32, %arg1: i32) -> (i32, i32) {
    %c0_i32 = arith.constant 0 : i32
    %c0_i32_0 = arith.constant 0 : i32
    return %c0_i32, %arg1 : i32, i32
  }
  func.func @transform_3(%arg0: i32, %arg1: i32) -> (i32, i32, i32) {
    %c0_i32 = arith.constant 0 : i32
    %c0_i32_0 = arith.constant 0 : i32
    return %c0_i32, %arg0, %arg1 : i32, i32, i32
  }
}

</mosaic_0001>

<llo_original>
// kernel: tpu_custom_call.1
$region0: #{tpu_custom_call.1}
  #allocation0 [shape = 'u32[]', space=smem, size = 0x4, offset = 0x4, fixed_abs, tag = 'smem constant byte address 0x4 - core index']
  #allocation1 [shape = 'u32[144,128]{1,0:T(1,128)}', space=vmem, size = 0x12000, scoped, tag = 'internal scratch']
  %s0 = inlined_call_operand.vmem [shape: f32[160,32], index: 0, kind: input, shape index: {}]
  %s1 = inlined_call_operand.vmem [shape: f32[8,32], index: 1, kind: input, shape index: {}]
  %s2 = inlined_call_operand.vmem [shape: f32[32,16], index: 2, kind: input, shape index: {}]
  %s3 = inlined_call_operand.hbm [shape: bf16[5,8,16], index: 3, kind: output, shape index: {}]
  %s4 = sld [smem:[#allocation0]]
  $region22: #{tpu_custom_call.1} parent=0
    _
  %s6 = ssub.s32 1, %s4
  %s7 = scalar_select 0, %s6, %s4
  $region1: #{tpu_custom_call.1} parent=0
    #allocation2 [shape = 'u8[10240]{0}', space=vmem, size = 0x2800, scoped, tag = 'output window, operand 0, single buffered']
    #allocation3 [shape = 's32[1]{0}', space=sflag, size = 0x4, scoped, tag = 'scoped memory for tpu_custom_call.1']
    %8 = vsyncpa [#allocation3], 0
    // Predicated region
    $region2: #{tpu_custom_call.1} parent=1 // pred_check
      _
    $region3: #{tpu_custom_call.1} parent=1 // pred_check_branch
      %10 = sbr.rel (0) target = $region5
    $region4: #{tpu_custom_call.1} parent=1 // pred_region
      _
    $region5: #{tpu_custom_call.1} parent=1 // pred_fallthru
      _
    // Predicated region
    $region6: #{tpu_custom_call.1} parent=1 // pred_check
      _
    $region7: #{tpu_custom_call.1} parent=1 // pred_check_branch
      %12 = sbr.rel (0) target = $region9
    $region8: #{tpu_custom_call.1} parent=1 // pred_region
      _
    $region9: #{tpu_custom_call.1} parent=1 // pred_fallthru
      _
    // Predicated region
    $region10: #{tpu_custom_call.1} parent=1 // pred_check
      _
    $region11: #{tpu_custom_call.1} parent=1 // pred_check_branch
      %14 = sbr.rel (0) target = $region13
    $region12: #{tpu_custom_call.1} parent=1 // pred_region
      _
    $region13: #{tpu_custom_call.1} parent=1 // pred_fallthru
      _
    %v15 = vld [vmem:[%s0] sm:$0xff]
    %v16 = vld [vmem:[%s0 + $0x8] sm:$0xff]
    %v17 = vld [vmem:[%s0 + $0x10] sm:$0xff]
    %v18 = vld [vmem:[%s0 + $0x18] sm:$0xff]
    %v19 = vld [vmem:[%s0 + $0x20] sm:$0xff]
    %v20 = vld [vmem:[%s0 + $0x28] sm:$0xff]
    %v21 = vld [vmem:[%s0 + $0x30] sm:$0xff]
    %v22 = vld [vmem:[%s0 + $0x38] sm:$0xff]
    %v23 = vld [vmem:[%s0 + $0x40] sm:$0xff]
    %v24 = vld [vmem:[%s0 + $0x48] sm:$0xff]
    %v25 = vld [vmem:[%s0 + $0x50] sm:$0xff]
    %v26 = vld [vmem:[%s0 + $0x58] sm:$0xff]
    %v27 = vld [vmem:[%s0 + $0x60] sm:$0xff]
    %v28 = vld [vmem:[%s0 + $0x68] sm:$0xff]
    %v29 = vld [vmem:[%s0 + $0x70] sm:$0xff]
    %v30 = vld [vmem:[%s0 + $0x78] sm:$0xff]
    %v31 = vld [vmem:[%s0 + $0x80] sm:$0xff]
    %v32 = vld [vmem:[%s0 + $0x88] sm:$0xff]
    %v33 = vld [vmem:[%s0 + $0x90] sm:$0xff]
    %v34 = vld [vmem:[%s0 + $0x98] sm:$0xff]
    %v35 = vld [vmem:[%s2] sm:$0xff]
    %v36 = vld [vmem:[%s2 + $0x8] sm:$0xff]
    %v37 = vld [vmem:[%s2 + $0x10] sm:$0xff]
    %v38 = vld [vmem:[%s2 + $0x18] sm:$0xff]
    %vm39 = vcmask 261120
    %v41 = vsel %vm39, %v15, 0
    %v44 = vsel %vm39, %v16, 0
    %v47 = vsel %vm39, %v17, 0
    %v50 = vsel %vm39, %v18, 0
    %v53 = vsel %vm39, %v19, 0
    %v56 = vsel %vm39, %v20, 0
    %v59 = vsel %vm39, %v21, 0
    %v62 = vsel %vm39, %v22, 0
    %v65 = vsel %vm39, %v23, 0
    %v68 = vsel %vm39, %v24, 0
    %v71 = vsel %vm39, %v25, 0
    %v74 = vsel %vm39, %v26, 0
    %v77 = vsel %vm39, %v27, 0
    %v80 = vsel %vm39, %v28, 0
    %v83 = vsel %vm39, %v29, 0
    %v86 = vsel %vm39, %v30, 0
    %v89 = vsel %vm39, %v31, 0
    %v92 = vsel %vm39, %v32, 0
    %v95 = vsel %vm39, %v33, 0
    %v98 = vsel %vm39, %v34, 0
    %100 = vmatprep.subr.mxu0 0.0
    %101 = vmatpush1.msra.mxu0 %v35
    %102 = vmatprep.subr.mxu0 0.0
    %103 = vmatpush1.msra.mxu0 %v36
    %104 = vmatprep.subr.mxu0 0.0
    %105 = vmatpush1.msra.mxu0 %v37
    %106 = vmatprep.subr.mxu0 0.0
    %107 = vmatpush1.msra.mxu0 %v38
    %108 = vmatprep.subr.mxu0 0.0
    %109 = vmatpush1.msra.mxu0 0.0
    %110 = vmatprep.subr.mxu0 0.0
    %111 = vmatpush1.msra.mxu0 0.0
    %112 = vmatprep.subr.mxu0 0.0
    %113 = vmatpush1.msra.mxu0 0.0
    %114 = vmatprep.subr.mxu0 0.0
    %115 = vmatpush1.msra.mxu0 0.0
    %116 = vmatprep.subr.mxu0 0.0
    %117 = vmatpush1.msra.mxu0 0.0
    %118 = vmatprep.subr.mxu0 0.0
    %119 = vmatpush1.msra.mxu0 0.0
    %120 = vmatprep.subr.mxu0 0.0
    %121 = vmatpush1.msra.mxu0 0.0
    %122 = vmatprep.subr.mxu0 0.0
    %123 = vmatpush1.msra.mxu0 0.0
    %124 = vmatprep.subr.mxu0 0.0
    %125 = vmatpush1.msra.mxu0 0.0
    %126 = vmatprep.subr.mxu0 0.0
    %127 = vmatpush1.msra.mxu0 0.0
    %128 = vmatprep.subr.mxu0 0.0
    %129 = vmatpush1.msra.mxu0 0.0
    %130 = vmatprep.subr.mxu0 0.0
    %131 = vmatpush1.msra.mxu0 0.0
    %132 = vmatprep.subr.mxu0 0.0
    %133 = vmatpush1.msra.mxu0 0.0
    %134 = vmatprep.subr.mxu0 0.0
    %135 = vmatpush1.msra.mxu0 0.0
    %136 = vmatprep.subr.mxu0 0.0
    %137 = vmatpush1.msra.mxu0 0.0
    %138 = vmatprep.subr.mxu0 0.0
    %139 = vmatpush1.msra.mxu0 0.0
    %140 = vmatprep.subr.mxu0 0.0
    %141 = vmatpush1.msra.mxu0 0.0
    %142 = vmatprep.subr.mxu0 0.0
    %143 = vmatpush1.msra.mxu0 0.0
    %144 = vmatprep.subr.mxu0 0.0
    %145 = vmatpush1.msra.mxu0 0.0
    %146 = vmatprep.subr.mxu0 0.0
    %147 = vmatpush1.msra.mxu0 0.0
    %148 = vmatprep.subr.mxu0 0.0
    %149 = vmatpush1.msra.mxu0 0.0
    %150 = vmatprep.subr.mxu0 0.0
    %151 = vmatpush1.msra.mxu0 0.0
    %152 = vmatprep.subr.mxu0 0.0
    %153 = vmatpush1.msra.mxu0 0.0
    %154 = vmatprep.subr.mxu0 0.0
    %155 = vmatpush1.msra.mxu0 0.0
    %156 = vmatprep.subr.mxu0 0.0
    %157 = vmatpush1.msra.mxu0 0.0
    %158 = vmatprep.subr.mxu0 0.0
    %159 = vmatpush1.msra.mxu0 0.0
    %160 = vmatprep.subr.mxu0 0.0
    %161 = vmatpush1.msra.mxu0 0.0
    %162 = vmatprep.subr.mxu0 0.0
    %163 = vmatpush1.msra.mxu0 0.0
    %164 = vmatprep.mubr.f32.mxu0 0.0
    %165 = vmatmul.mubr.f32.gmra.mrb[0].mxu0 %v41
    %v166 = vpop.f32.mrb[0].mxu0
    %v167 = vadd.f32 0.0, %v166
    %v168 = vpop.f32.mrb[0].mxu0
    %169 = vmatprep.mubr.f32.mxu0 0.0
    %170 = vmatmul.mubr.f32.gmra.mrb[0].mxu0 %v44
    %v171 = vpop.f32.mrb[0].mxu0
    %v172 = vadd.f32 0.0, %v171
    %v173 = vpop.f32.mrb[0].mxu0
    %174 = vmatprep.mubr.f32.mxu0 0.0
    %175 = vmatmul.mubr.f32.gmra.mrb[0].mxu0 %v47
    %v176 = vpop.f32.mrb[0].mxu0
    %v177 = vadd.f32 0.0, %v176
    %v178 = vpop.f32.mrb[0].mxu0
    %179 = vmatprep.mubr.f32.mxu0 0.0
    %180 = vmatmul.mubr.f32.gmra.mrb[0].mxu0 %v50
    %v181 = vpop.f32.mrb[0].mxu0
    %v182 = vadd.f32 0.0, %v181
    %v183 = vpop.f32.mrb[0].mxu0
    %184 = vmatprep.mubr.f32.mxu0 0.0
    %185 = vmatmul.mubr.f32.gmra.mrb[0].mxu0 %v53
    %v186 = vpop.f32.mrb[0].mxu0
    %v187 = vadd.f32 0.0, %v186
    %v188 = vpop.f32.mrb[0].mxu0
    %189 = vmatprep.mubr.f32.mxu0 0.0
    %190 = vmatmul.mubr.f32.gmra.mrb[0].mxu0 %v56
    %v191 = vpop.f32.mrb[0].mxu0
    %v192 = vadd.f32 0.0, %v191
    %v193 = vpop.f32.mrb[0].mxu0
    %194 = vmatprep.mubr.f32.mxu0 0.0
    %195 = vmatmul.mubr.f32.gmra.mrb[0].mxu0 %v59
    %v196 = vpop.f32.mrb[0].mxu0
    %v197 = vadd.f32 0.0, %v196
    %v198 = vpop.f32.mrb[0].mxu0
    %199 = vmatprep.mubr.f32.mxu0 0.0
    %200 = vmatmul.mubr.f32.gmra.mrb[0].mxu0 %v62
    %v201 = vpop.f32.mrb[0].mxu0
    %v202 = vadd.f32 0.0, %v201
    %v203 = vpop.f32.mrb[0].mxu0
    %204 = vmatprep.mubr.f32.mxu0 0.0
    %205 = vmatmul.mubr.f32.gmra.mrb[0].mxu0 %v65
    %v206 = vpop.f32.mrb[0].mxu0
    %v207 = vadd.f32 0.0, %v206
    %v208 = vpop.f32.mrb[0].mxu0
    %209 = vmatprep.mubr.f32.mxu0 0.0
    %210 = vmatmul.mubr.f32.gmra.mrb[0].mxu0 %v68
    %v211 = vpop.f32.mrb[0].mxu0
    %v212 = vadd.f32 0.0, %v211
    %v213 = vpop.f32.mrb[0].mxu0
    %214 = vmatprep.mubr.f32.mxu0 0.0
    %215 = vmatmul.mubr.f32.gmra.mrb[0].mxu0 %v71
    %v216 = vpop.f32.mrb[0].mxu0
    %v217 = vadd.f32 0.0, %v216
    %v218 = vpop.f32.mrb[0].mxu0
    %219 = vmatprep.mubr.f32.mxu0 0.0
    %220 = vmatmul.mubr.f32.gmra.mrb[0].mxu0 %v74
    %v221 = vpop.f32.mrb[0].mxu0
    %v222 = vadd.f32 0.0, %v221
    %v223 = vpop.f32.mrb[0].mxu0
    %224 = vmatprep.mubr.f32.mxu0 0.0
    %225 = vmatmul.mubr.f32.gmra.mrb[0].mxu0 %v77
    %v226 = vpop.f32.mrb[0].mxu0
    %v227 = vadd.f32 0.0, %v226
    %v228 = vpop.f32.mrb[0].mxu0
    %229 = vmatprep.mubr.f32.mxu0 0.0
    %230 = vmatmul.mubr.f32.gmra.mrb[0].mxu0 %v80
    %v231 = vpop.f32.mrb[0].mxu0
    %v232 = vadd.f32 0.0, %v231
    %v233 = vpop.f32.mrb[0].mxu0
    %234 = vmatprep.mubr.f32.mxu0 0.0
    %235 = vmatmul.mubr.f32.gmra.mrb[0].mxu0 %v83
    %v236 = vpop.f32.mrb[0].mxu0
    %v237 = vadd.f32 0.0, %v236
    %v238 = vpop.f32.mrb[0].mxu0
    %239 = vmatprep.mubr.f32.mxu0 0.0
    %240 = vmatmul.mubr.f32.gmra.mrb[0].mxu0 %v86
    %v241 = vpop.f32.mrb[0].mxu0
    %v242 = vadd.f32 0.0, %v241
    %v243 = vpop.f32.mrb[0].mxu0
    %244 = vmatprep.mubr.f32.mxu0 0.0
    %245 = vmatmul.mubr.f32.gmra.mrb[0].mxu0 %v89
    %v246 = vpop.f32.mrb[0].mxu0
    %v247 = vadd.f32 0.0, %v246
    %v248 = vpop.f32.mrb[0].mxu0
    %249 = vmatprep.mubr.f32.mxu0 0.0
    %250 = vmatmul.mubr.f32.gmra.mrb[0].mxu0 %v92
    %v251 = vpop.f32.mrb[0].mxu0
    %v252 = vadd.f32 0.0, %v251
    %v253 = vpop.f32.mrb[0].mxu0
    %254 = vmatprep.mubr.f32.mxu0 0.0
    %255 = vmatmul.mubr.f32.gmra.mrb[0].mxu0 %v95
    %v256 = vpop.f32.mrb[0].mxu0
    %v257 = vadd.f32 0.0, %v256
    %v258 = vpop.f32.mrb[0].mxu0
    %259 = vmatprep.mubr.f32.mxu0 0.0
    %260 = vmatmul.mubr.f32.gmra.mrb[0].mxu0 %v98
    %v261 = vpop.f32.mrb[0].mxu0
    %v262 = vadd.f32 0.0, %v261
    %v263 = vpop.f32.mrb[0].mxu0
    %264 = vdwg.mxu0
    %v265 = vld [vmem:[%s1] sm:$0xff]
    %v267 = vsel %vm39, %v265, 0
    %269 = vmatprep.subr.mxu0 0.0
    %270 = vmatpush1.msra.mxu0 %v167
    %271 = vmatprep.subr.mxu0 0.0
    %272 = vmatpush1.msra.mxu0 %v172
    %273 = vmatprep.subr.mxu0 0.0
    %274 = vmatpush1.msra.mxu0 %v177
    %275 = vmatprep.subr.mxu0 0.0
    %276 = vmatpush1.msra.mxu0 %v182
    %277 = vmatprep.subr.mxu0 0.0
    %278 = vmatpush1.msra.mxu0 0.0
    %279 = vmatprep.subr.mxu0 0.0
    %280 = vmatpush1.msra.mxu0 0.0
    %281 = vmatprep.subr.mxu0 0.0
    %282 = vmatpush1.msra.mxu0 0.0
    %283 = vmatprep.subr.mxu0 0.0
    %284 = vmatpush1.msra.mxu0 0.0
    %285 = vmatprep.subr.mxu0 0.0
    %286 = vmatpush1.msra.mxu0 0.0
    %287 = vmatprep.subr.mxu0 0.0
    %288 = vmatpush1.msra.mxu0 0.0
    %289 = vmatprep.subr.mxu0 0.0
    %290 = vmatpush1.msra.mxu0 0.0
    %291 = vmatprep.subr.mxu0 0.0
    %292 = vmatpush1.msra.mxu0 0.0
    %293 = vmatprep.subr.mxu0 0.0
    %294 = vmatpush1.msra.mxu0 0.0
    %295 = vmatprep.subr.mxu0 0.0
    %296 = vmatpush1.msra.mxu0 0.0
    %297 = vmatprep.subr.mxu0 0.0
    %298 = vmatpush1.msra.mxu0 0.0
    %299 = vmatprep.subr.mxu0 0.0
    %300 = vmatpush1.msra.mxu0 0.0
    %301 = vmatprep.subr.mxu0 0.0
    %302 = vmatpush1.msra.mxu0 0.0
    %303 = vmatprep.subr.mxu0 0.0
    %304 = vmatpush1.msra.mxu0 0.0
    %305 = vmatprep.subr.mxu0 0.0
    %306 = vmatpush1.msra.mxu0 0.0
    %307 = vmatprep.subr.mxu0 0.0
    %308 = vmatpush1.msra.mxu0 0.0
    %309 = vmatprep.subr.mxu0 0.0
    %310 = vmatpush1.msra.mxu0 0.0
    %311 = vmatprep.subr.mxu0 0.0
    %312 = vmatpush1.msra.mxu0 0.0
    %313 = vmatprep.subr.mxu0 0.0
    %314 = vmatpush1.msra.mxu0 0.0
    %315 = vmatprep.subr.mxu0 0.0
    %316 = vmatpush1.msra.mxu0 0.0
    %317 = vmatprep.subr.mxu0 0.0
    %318 = vmatpush1.msra.mxu0 0.0
    %319 = vmatprep.subr.mxu0 0.0
    %320 = vmatpush1.msra.mxu0 0.0
    %321 = vmatprep.subr.mxu0 0.0
    %322 = vmatpush1.msra.mxu0 0.0
    %323 = vmatprep.subr.mxu0 0.0
    %324 = vmatpush1.msra.mxu0 0.0
    %325 = vmatprep.subr.mxu0 0.0
    %326 = vmatpush1.msra.mxu0 0.0
    %327 = vmatprep.subr.mxu0 0.0
    %328 = vmatpush1.msra.mxu0 0.0
    %329 = vmatprep.subr.mxu0 0.0
    %330 = vmatpush1.msra.mxu0 0.0
    %331 = vmatprep.subr.mxu0 0.0
    %332 = vmatpush1.msra.mxu0 0.0
    %333 = vmatprep.mubr.f32.mxu0 0.0
    %334 = vmatmul.mubr.f32.gmra.mrb[0].mxu0 %v267
    %v335 = vpop.f32.mrb[0].mxu0
    %v336 = vadd.f32 0.0, %v335
    %v337 = vpop.f32.mrb[0].mxu0
    %338 = vdwg.mxu0
    %v339 = vpack.c.bf16 %v336, %v336
    %vm340 = vcmask 125952
    %341 = vst.msk [vmem:[#allocation2] sm:$0xf] %vm340, %v339
    %342 = vmatprep.subr.mxu0 0.0
    %343 = vmatpush1.msra.mxu0 %v187
    %344 = vmatprep.subr.mxu0 0.0
    %345 = vmatpush1.msra.mxu0 %v192
    %346 = vmatprep.subr.mxu0 0.0
    %347 = vmatpush1.msra.mxu0 %v197
    %348 = vmatprep.subr.mxu0 0.0
    %349 = vmatpush1.msra.mxu0 %v202
    %350 = vmatprep.subr.mxu0 0.0
    %351 = vmatpush1.msra.mxu0 0.0
    %352 = vmatprep.subr.mxu0 0.0
    %353 = vmatpush1.msra.mxu0 0.0
    %354 = vmatprep.subr.mxu0 0.0
    %355 = vmatpush1.msra.mxu0 0.0
    %356 = vmatprep.subr.mxu0 0.0
    %357 = vmatpush1.msra.mxu0 0.0
    %358 = vmatprep.subr.mxu0 0.0
    %359 = vmatpush1.msra.mxu0 0.0
    %360 = vmatprep.subr.mxu0 0.0
    %361 = vmatpush1.msra.mxu0 0.0
    %362 = vmatprep.subr.mxu0 0.0
    %363 = vmatpush1.msra.mxu0 0.0
    %364 = vmatprep.subr.mxu0 0.0
    %365 = vmatpush1.msra.mxu0 0.0
    %366 = vmatprep.subr.mxu0 0.0
    %367 = vmatpush1.msra.mxu0 0.0
    %368 = vmatprep.subr.mxu0 0.0
    %369 = vmatpush1.msra.mxu0 0.0
    %370 = vmatprep.subr.mxu0 0.0
    %371 = vmatpush1.msra.mxu0 0.0
    %372 = vmatprep.subr.mxu0 0.0
    %373 = vmatpush1.msra.mxu0 0.0
    %374 = vmatprep.subr.mxu0 0.0
    %375 = vmatpush1.msra.mxu0 0.0
    %376 = vmatprep.subr.mxu0 0.0
    %377 = vmatpush1.msra.mxu0 0.0
    %378 = vmatprep.subr.mxu0 0.0
    %379 = vmatpush1.msra.mxu0 0.0
    %380 = vmatprep.subr.mxu0 0.0
    %381 = vmatpush1.msra.mxu0 0.0
    %382 = vmatprep.subr.mxu0 0.0
    %383 = vmatpush1.msra.mxu0 0.0
    %384 = vmatprep.subr.mxu0 0.0
    %385 = vmatpush1.msra.mxu0 0.0
    %386 = vmatprep.subr.mxu0 0.0
    %387 = vmatpush1.msra.mxu0 0.0
    %388 = vmatprep.subr.mxu0 0.0
    %389 = vmatpush1.msra.mxu0 0.0
    %390 = vmatprep.subr.mxu0 0.0
    %391 = vmatpush1.msra.mxu0 0.0
    %392 = vmatprep.subr.mxu0 0.0
    %393 = vmatpush1.msra.mxu0 0.0
    %394 = vmatprep.subr.mxu0 0.0
    %395 = vmatpush1.msra.mxu0 0.0
    %396 = vmatprep.subr.mxu0 0.0
    %397 = vmatpush1.msra.mxu0 0.0
    %398 = vmatprep.subr.mxu0 0.0
    %399 = vmatpush1.msra.mxu0 0.0
    %400 = vmatprep.subr.mxu0 0.0
    %401 = vmatpush1.msra.mxu0 0.0
    %402 = vmatprep.subr.mxu0 0.0
    %403 = vmatpush1.msra.mxu0 0.0
    %404 = vmatprep.subr.mxu0 0.0
    %405 = vmatpush1.msra.mxu0 0.0
    %406 = vmatprep.mubr.f32.mxu0 0.0
    %407 = vmatmul.mubr.f32.gmra.mrb[0].mxu0 %v267
    %v408 = vpop.f32.mrb[0].mxu0
    %v409 = vadd.f32 0.0, %v408
    %v410 = vpop.f32.mrb[0].mxu0
    %411 = vdwg.mxu0
    %v412 = vpack.c.bf16 %v409, %v409
    %s413 = scalar_lea.vmem [#allocation2], 4
    %414 = vst.msk [vmem:[%s413] sm:$0xf] %vm340, %v412
    %415 = vmatprep.subr.mxu0 0.0
    %416 = vmatpush1.msra.mxu0 %v207
    %417 = vmatprep.subr.mxu0 0.0
    %418 = vmatpush1.msra.mxu0 %v212
    %419 = vmatprep.subr.mxu0 0.0
    %420 = vmatpush1.msra.mxu0 %v217
    %421 = vmatprep.subr.mxu0 0.0
    %422 = vmatpush1.msra.mxu0 %v222
    %423 = vmatprep.subr.mxu0 0.0
    %424 = vmatpush1.msra.mxu0 0.0
    %425 = vmatprep.subr.mxu0 0.0
    %426 = vmatpush1.msra.mxu0 0.0
    %427 = vmatprep.subr.mxu0 0.0
    %428 = vmatpush1.msra.mxu0 0.0
    %429 = vmatprep.subr.mxu0 0.0
    %430 = vmatpush1.msra.mxu0 0.0
    %431 = vmatprep.subr.mxu0 0.0
    %432 = vmatpush1.msra.mxu0 0.0
    %433 = vmatprep.subr.mxu0 0.0
    %434 = vmatpush1.msra.mxu0 0.0
    %435 = vmatprep.subr.mxu0 0.0
    %436 = vmatpush1.msra.mxu0 0.0
    %437 = vmatprep.subr.mxu0 0.0
    %438 = vmatpush1.msra.mxu0 0.0
    %439 = vmatprep.subr.mxu0 0.0
    %440 = vmatpush1.msra.mxu0 0.0
    %441 = vmatprep.subr.mxu0 0.0
    %442 = vmatpush1.msra.mxu0 0.0
    %443 = vmatprep.subr.mxu0 0.0
    %444 = vmatpush1.msra.mxu0 0.0
    %445 = vmatprep.subr.mxu0 0.0
    %446 = vmatpush1.msra.mxu0 0.0
    %447 = vmatprep.subr.mxu0 0.0
    %448 = vmatpush1.msra.mxu0 0.0
    %449 = vmatprep.subr.mxu0 0.0
    %450 = vmatpush1.msra.mxu0 0.0
    %451 = vmatprep.subr.mxu0 0.0
    %452 = vmatpush1.msra.mxu0 0.0
    %453 = vmatprep.subr.mxu0 0.0
    %454 = vmatpush1.msra.mxu0 0.0
    %455 = vmatprep.subr.mxu0 0.0
    %456 = vmatpush1.msra.mxu0 0.0
    %457 = vmatprep.subr.mxu0 0.0
    %458 = vmatpush1.msra.mxu0 0.0
    %459 = vmatprep.subr.mxu0 0.0
    %460 = vmatpush1.msra.mxu0 0.0
    %461 = vmatprep.subr.mxu0 0.0
    %462 = vmatpush1.msra.mxu0 0.0
    %463 = vmatprep.subr.mxu0 0.0
    %464 = vmatpush1.msra.mxu0 0.0
    %465 = vmatprep.subr.mxu0 0.0
    %466 = vmatpush1.msra.mxu0 0.0
    %467 = vmatprep.subr.mxu0 0.0
    %468 = vmatpush1.msra.mxu0 0.0
    %469 = vmatprep.subr.mxu0 0.0
    %470 = vmatpush1.msra.mxu0 0.0
    %471 = vmatprep.subr.mxu0 0.0
    %472 = vmatpush1.msra.mxu0 0.0
    %473 = vmatprep.subr.mxu0 0.0
    %474 = vmatpush1.msra.mxu0 0.0
    %475 = vmatprep.subr.mxu0 0.0
    %476 = vmatpush1.msra.mxu0 0.0
    %477 = vmatprep.subr.mxu0 0.0
    %478 = vmatpush1.msra.mxu0 0.0
    %479 = vmatprep.mubr.f32.mxu0 0.0
    %480 = vmatmul.mubr.f32.gmra.mrb[0].mxu0 %v267
    %v481 = vpop.f32.mrb[0].mxu0
    %v482 = vadd.f32 0.0, %v481
    %v483 = vpop.f32.mrb[0].mxu0
    %484 = vdwg.mxu0
    %v485 = vpack.c.bf16 %v482, %v482
    %s486 = scalar_lea.vmem [#allocation2], 8
    %487 = vst.msk [vmem:[%s486] sm:$0xf] %vm340, %v485
    %488 = vmatprep.subr.mxu0 0.0
    %489 = vmatpush1.msra.mxu0 %v227
    %490 = vmatprep.subr.mxu0 0.0
    %491 = vmatpush1.msra.mxu0 %v232
    %492 = vmatprep.subr.mxu0 0.0
    %493 = vmatpush1.msra.mxu0 %v237
    %494 = vmatprep.subr.mxu0 0.0
    %495 = vmatpush1.msra.mxu0 %v242
    %496 = vmatprep.subr.mxu0 0.0
    %497 = vmatpush1.msra.mxu0 0.0
    %498 = vmatprep.subr.mxu0 0.0
    %499 = vmatpush1.msra.mxu0 0.0
    %500 = vmatprep.subr.mxu0 0.0
    %501 = vmatpush1.msra.mxu0 0.0
    %502 = vmatprep.subr.mxu0 0.0
    %503 = vmatpush1.msra.mxu0 0.0
    %504 = vmatprep.subr.mxu0 0.0
    %505 = vmatpush1.msra.mxu0 0.0
    %506 = vmatprep.subr.mxu0 0.0
    %507 = vmatpush1.msra.mxu0 0.0
    %508 = vmatprep.subr.mxu0 0.0
    %509 = vmatpush1.msra.mxu0 0.0
    %510 = vmatprep.subr.mxu0 0.0
    %511 = vmatpush1.msra.mxu0 0.0
    %512 = vmatprep.subr.mxu0 0.0
    %513 = vmatpush1.msra.mxu0 0.0
    %514 = vmatprep.subr.mxu0 0.0
    %515 = vmatpush1.msra.mxu0 0.0
    %516 = vmatprep.subr.mxu0 0.0
    %517 = vmatpush1.msra.mxu0 0.0
    %518 = vmatprep.subr.mxu0 0.0
    %519 = vmatpush1.msra.mxu0 0.0
    %520 = vmatprep.subr.mxu0 0.0
    %521 = vmatpush1.msra.mxu0 0.0
    %522 = vmatprep.subr.mxu0 0.0
    %523 = vmatpush1.msra.mxu0 0.0
    %524 = vmatprep.subr.mxu0 0.0
    %525 = vmatpush1.msra.mxu0 0.0
    %526 = vmatprep.subr.mxu0 0.0
    %527 = vmatpush1.msra.mxu0 0.0
    %528 = vmatprep.subr.mxu0 0.0
    %529 = vmatpush1.msra.mxu0 0.0
    %530 = vmatprep.subr.mxu0 0.0
    %531 = vmatpush1.msra.mxu0 0.0
    %532 = vmatprep.subr.mxu0 0.0
    %533 = vmatpush1.msra.mxu0 0.0
    %534 = vmatprep.subr.mxu0 0.0
    %535 = vmatpush1.msra.mxu0 0.0
    %536 = vmatprep.subr.mxu0 0.0
    %537 = vmatpush1.msra.mxu0 0.0
    %538 = vmatprep.subr.mxu0 0.0
    %539 = vmatpush1.msra.mxu0 0.0
    %540 = vmatprep.subr.mxu0 0.0
    %541 = vmatpush1.msra.mxu0 0.0
    %542 = vmatprep.subr.mxu0 0.0
    %543 = vmatpush1.msra.mxu0 0.0
    %544 = vmatprep.subr.mxu0 0.0
    %545 = vmatpush1.msra.mxu0 0.0
    %546 = vmatprep.subr.mxu0 0.0
    %547 = vmatpush1.msra.mxu0 0.0
    %548 = vmatprep.subr.mxu0 0.0
    %549 = vmatpush1.msra.mxu0 0.0
    %550 = vmatprep.subr.mxu0 0.0
    %551 = vmatpush1.msra.mxu0 0.0
    %552 = vmatprep.mubr.f32.mxu0 0.0
    %553 = vmatmul.mubr.f32.gmra.mrb[0].mxu0 %v267
    %v554 = vpop.f32.mrb[0].mxu0
    %v555 = vadd.f32 0.0, %v554
    %v556 = vpop.f32.mrb[0].mxu0
    %557 = vdwg.mxu0
    %v558 = vpack.c.bf16 %v555, %v555
    %s559 = scalar_lea.vmem [#allocation2], 12
    %560 = vst.msk [vmem:[%s559] sm:$0xf] %vm340, %v558
    %561 = vmatprep.subr.mxu0 0.0
    %562 = vmatpush1.msra.mxu0 %v247
    %563 = vmatprep.subr.mxu0 0.0
    %564 = vmatpush1.msra.mxu0 %v252
    %565 = vmatprep.subr.mxu0 0.0
    %566 = vmatpush1.msra.mxu0 %v257
    %567 = vmatprep.subr.mxu0 0.0
    %568 = vmatpush1.msra.mxu0 %v262
    %569 = vmatprep.subr.mxu0 0.0
    %570 = vmatpush1.msra.mxu0 0.0
    %571 = vmatprep.subr.mxu0 0.0
    %572 = vmatpush1.msra.mxu0 0.0
    %573 = vmatprep.subr.mxu0 0.0
    %574 = vmatpush1.msra.mxu0 0.0
    %575 = vmatprep.subr.mxu0 0.0
    %576 = vmatpush1.msra.mxu0 0.0
    %577 = vmatprep.subr.mxu0 0.0
    %578 = vmatpush1.msra.mxu0 0.0
    %579 = vmatprep.subr.mxu0 0.0
    %580 = vmatpush1.msra.mxu0 0.0
    %581 = vmatprep.subr.mxu0 0.0
    %582 = vmatpush1.msra.mxu0 0.0
    %583 = vmatprep.subr.mxu0 0.0
    %584 = vmatpush1.msra.mxu0 0.0
    %585 = vmatprep.subr.mxu0 0.0
    %586 = vmatpush1.msra.mxu0 0.0
    %587 = vmatprep.subr.mxu0 0.0
    %588 = vmatpush1.msra.mxu0 0.0
    %589 = vmatprep.subr.mxu0 0.0
    %590 = vmatpush1.msra.mxu0 0.0
    %591 = vmatprep.subr.mxu0 0.0
    %592 = vmatpush1.msra.mxu0 0.0
    %593 = vmatprep.subr.mxu0 0.0
    %594 = vmatpush1.msra.mxu0 0.0
    %595 = vmatprep.subr.mxu0 0.0
    %596 = vmatpush1.msra.mxu0 0.0
    %597 = vmatprep.subr.mxu0 0.0
    %598 = vmatpush1.msra.mxu0 0.0
    %599 = vmatprep.subr.mxu0 0.0
    %600 = vmatpush1.msra.mxu0 0.0
    %601 = vmatprep.subr.mxu0 0.0
    %602 = vmatpush1.msra.mxu0 0.0
    %603 = vmatprep.subr.mxu0 0.0
    %604 = vmatpush1.msra.mxu0 0.0
    %605 = vmatprep.subr.mxu0 0.0
    %606 = vmatpush1.msra.mxu0 0.0
    %607 = vmatprep.subr.mxu0 0.0
    %608 = vmatpush1.msra.mxu0 0.0
    %609 = vmatprep.subr.mxu0 0.0
    %610 = vmatpush1.msra.mxu0 0.0
    %611 = vmatprep.subr.mxu0 0.0
    %612 = vmatpush1.msra.mxu0 0.0
    %613 = vmatprep.subr.mxu0 0.0
    %614 = vmatpush1.msra.mxu0 0.0
    %615 = vmatprep.subr.mxu0 0.0
    %616 = vmatpush1.msra.mxu0 0.0
    %617 = vmatprep.subr.mxu0 0.0
    %618 = vmatpush1.msra.mxu0 0.0
    %619 = vmatprep.subr.mxu0 0.0
    %620 = vmatpush1.msra.mxu0 0.0
    %621 = vmatprep.subr.mxu0 0.0
    %622 = vmatpush1.msra.mxu0 0.0
    %623 = vmatprep.subr.mxu0 0.0
    %624 = vmatpush1.msra.mxu0 0.0
    %625 = vmatprep.mubr.f32.mxu0 0.0
    %626 = vmatmul.mubr.f32.gmra.mrb[0].mxu0 %v267
    %v627 = vpop.f32.mrb[0].mxu0
    %v628 = vadd.f32 0.0, %v627
    %v629 = vpop.f32.mrb[0].mxu0
    %630 = vdwg.mxu0
    %v631 = vpack.c.bf16 %v628, %v628
    %s632 = scalar_lea.vmem [#allocation2], 16
    %633 = vst.msk [vmem:[%s632] sm:$0xf] %vm340, %v631
    // Predicated region
    $region14: #{tpu_custom_call.1} parent=1 // pred_check
      _
    $region15: #{tpu_custom_call.1} parent=1 // pred_check_branch
      %635 = sbr.rel (0) target = $region17
    $region16: #{tpu_custom_call.1} parent=1 // pred_region
      %s637 = ssub.s32 320, 320
      %638 = vsyncadd [#allocation3], %s637
      %s639 = sshll.u32 [#allocation2], 4
      %s640 = int_to_ptr.vmem [resolvable:$true] %s639
      %645 = dma.vmem_to_hbm [thread:$0]  %s640, 320, %s3, [#allocation3], 64, 64, 4
    $region17: #{tpu_custom_call.1} parent=1 // pred_fallthru
      _
    // Predicated region
    $region18: #{tpu_custom_call.1} parent=1 // pred_check
      _
    $region19: #{tpu_custom_call.1} parent=1 // pred_check_branch
      %647 = sbr.rel (0) target = $region21
    $region20: #{tpu_custom_call.1} parent=1 // pred_region
      %648 = dma.done [#allocation3], 320
    $region21: #{tpu_custom_call.1} parent=1 // pred_fallthru
      _
    %649 = vsyncpa [#allocation3], 1

</llo_original>
